<compile_context>
chip_gen: v6e
topology: v6e:2x2x1
jax: 0.10.0
libtpu: 0.0.40
codegen_flags: <defaults>
</compile_context>

<pallas_src>
import jax
import jax.numpy as jnp
import numpy as np
from jax.experimental import pallas as pl
from jax.experimental.pallas import tpu as pltpu

EPS = 1e-5
TILE_M = 512  # voxels per grid step; multiple of 128 (lane axis of the outputs)


def _conv_stats_kernel(xcol_ref, w_ref, conv_ref, stats_ref):
    """Pass 1: fused 27-tap conv as one (Cout,K)@(K,TM) matmul + per-tile BN partials.

    xcol_ref : (K, TM)      transposed im2col columns for this M-tile (K = 27*Cin)
    w_ref    : (Cout, K)    fused conv weight (taps folded into K)
    conv_ref : (Cout, TM)   conv output tile (lane-dense: TM on the lane axis)
    stats_ref: (1, Cout, 2) per-tile [sum, sum-of-squares] over this tile's rows
    """
    conv = jnp.dot(w_ref[...], xcol_ref[...], preferred_element_type=jnp.float32)
    conv_ref[...] = conv
    s = jnp.sum(conv, axis=1, keepdims=True)           # (Cout, 1)
    ss = jnp.sum(conv * conv, axis=1, keepdims=True)   # (Cout, 1)
    stats_ref[0] = jnp.concatenate([s, ss], axis=1)    # (Cout, 2)


def _bn_relu_kernel(conv_ref, p_ref, o_ref):
    """Pass 2: y = relu(conv * scale + shift); scale/shift precomputed per channel.

    conv_ref : (Cout, TM)
    p_ref    : (Cout, 2)   column 0 = scale = gamma*rsqrt(var+eps), column 1 = shift
    o_ref    : (Cout, TM)
    """
    scale = p_ref[:, 0:1]
    shift = p_ref[:, 1:2]
    o_ref[...] = jnp.maximum(conv_ref[...] * scale + shift, 0.0).astype(o_ref.dtype)


@jax.jit
def luconv_forward(x, conv_w, conv_b, bn_gamma, bn_beta):
    """x: (N, Cin, D, H, W) float32 (PyTorch NCDHW). Returns (N, Cout, D, H, W)."""
    del conv_b  # exactly cancelled by the batch-statistics BN mean subtraction
    N, Cin, D, H, W = x.shape
    Cout = conv_w.shape[0]
    M = N * D * H * W
    K = 27 * Cin

    tm = TILE_M
    n_tiles = -(-M // tm)
    Mp = n_tiles * tm

    # ---- wrapper glue: zero-pad spatial dims, build transposed fused im2col (K, Mp) ----
    xf = x.astype(jnp.float32)
    xp = jnp.pad(xf, ((0, 0), (0, 0), (1, 1), (1, 1), (1, 1)))     # (N, Cin, D+2, H+2, W+2)
    taps = [xp[:, :, kd:kd + D, kh:kh + H, kw:kw + W]
            for kd in range(3) for kh in range(3) for kw in range(3)]
    xcol = jnp.stack(taps, axis=0)                                  # (27, N, Cin, D, H, W)
    xcol = jnp.transpose(xcol, (0, 2, 1, 3, 4, 5)).reshape(K, M)    # tap-major, cin-minor
    xcol = jnp.pad(xcol, ((0, 0), (0, Mp - M)))   # zero cols -> contribute 0 to conv/stats

    # PyTorch weight (Cout, Cin, kd, kh, kw) -> (Cout, K) with matching K ordering
    w_t = jnp.transpose(conv_w, (0, 2, 3, 4, 1)).reshape(Cout, K).astype(jnp.float32)

    cparams = pltpu.CompilerParams(
        dimension_semantics=("parallel",),
        vmem_limit_bytes=32 * 1024 * 1024,
    )

    # ---- pass 1: conv (fused taps) + per-tile partial statistics ----
    conv_t, stats = pl.pallas_call(
        _conv_stats_kernel,
        out_shape=(jax.ShapeDtypeStruct((Cout, Mp), jnp.float32),
                   jax.ShapeDtypeStruct((n_tiles, Cout, 2), jnp.float32)),
        grid=(n_tiles,),
        in_specs=[pl.BlockSpec((K, tm), lambda i: (0, i)),
                  pl.BlockSpec((Cout, K), lambda i: (0, 0))],
        out_specs=(pl.BlockSpec((Cout, tm), lambda i: (0, i)),
                   pl.BlockSpec((1, Cout, 2), lambda i: (i, 0, 0))),
        compiler_params=cparams,
    )(xcol, w_t)

    # ---- tiny global reduction: batch mean/var (training-mode BN, biased variance) ----
    mean = jnp.sum(stats[:, :, 0], axis=0) / M
    var = jnp.maximum(jnp.sum(stats[:, :, 1], axis=0) / M - mean * mean, 0.0)
    scale = bn_gamma.astype(jnp.float32) * jax.lax.rsqrt(var + EPS)
    shift = bn_beta.astype(jnp.float32) - mean * scale
    params = jnp.stack([scale, shift], axis=1)                      # (Cout, 2)

    # ---- pass 2: fused per-channel scale/shift + ReLU ----
    out_t = pl.pallas_call(
        _bn_relu_kernel,
        out_shape=jax.ShapeDtypeStruct((Cout, Mp), jnp.float32),
        grid=(n_tiles,),
        in_specs=[pl.BlockSpec((Cout, tm), lambda i: (0, i)),
                  pl.BlockSpec((Cout, 2), lambda i: (0, 0))],
        out_specs=pl.BlockSpec((Cout, tm), lambda i: (0, i)),
        compiler_params=cparams,
    )(conv_t, params)

    out = out_t[:, :M].reshape(Cout, N, D, H, W)
    return jnp.transpose(out, (1, 0, 2, 3, 4))                      # back to NCDHW


def _reference(x, conv_w, conv_b, bn_gamma, bn_beta):
    """Pure-JAX reference of LUConv.forward (act='relu')."""
    conv = jax.lax.conv_general_dilated(
        x, conv_w, window_strides=(1, 1, 1), padding="SAME",
        dimension_numbers=("NCDHW", "OIDHW", "NCDHW"),
    ) + conv_b.reshape(1, -1, 1, 1, 1)
    mean = jnp.mean(conv, axis=(0, 2, 3, 4), keepdims=True)
    var = jnp.mean(jnp.square(conv - mean), axis=(0, 2, 3, 4), keepdims=True)
    xn = (conv - mean) * jax.lax.rsqrt(var + EPS)
    y = xn * bn_gamma.reshape(1, -1, 1, 1, 1) + bn_beta.reshape(1, -1, 1, 1, 1)
    return jnp.maximum(y, 0.0)


if __name__ == "__main__":
    # Small shapes consistent with LUConv(in_chan=4, out_chan=8, act='relu') on 3D input.
    N, Cin, Cout, D, H, W = 2, 4, 8, 8, 8, 8

    key = jax.random.PRNGKey(0)
    k_x, k_w, k_b, k_g, k_be = jax.random.split(key, 5)

    x = jax.random.normal(k_x, (N, Cin, D, H, W), dtype=jnp.float32)
    conv_w = 0.1 * jax.random.normal(k_w, (Cout, Cin, 3, 3, 3), dtype=jnp.float32)
    conv_b = 0.1 * jax.random.normal(k_b, (Cout,), dtype=jnp.float32)
    bn_gamma = 1.0 + 0.1 * jax.random.normal(k_g, (Cout,), dtype=jnp.float32)
    bn_beta = 0.1 * jax.random.normal(k_be, (Cout,), dtype=jnp.float32)

    out = luconv_forward(x, conv_w, conv_b, bn_gamma, bn_beta)
    out = jax.block_until_ready(out)

    ref = jax.block_until_ready(_reference(x, conv_w, conv_b, bn_gamma, bn_beta))
    np.testing.assert_allclose(np.asarray(out), np.asarray(ref), rtol=1e-4, atol=1e-4)

    print("KERNEL_OK")
</pallas_src>

<mosaic_0001>
module attributes {stable_mosaic.version = 11 : i64} {
  func.func @_conv_stats_kernel(%arg0: i32, %arg1: memref<108x512xf32, #tpu.memory_space<vmem>>, %arg2: memref<8x108xf32, #tpu.memory_space<vmem>>, %arg3: memref<8x512xf32, #tpu.memory_space<vmem>>, %arg4: memref<1x8x2xf32, #tpu.memory_space<vmem>>) attributes {dimension_semantics = [#tpu.dimension_semantics<parallel>], iteration_bounds = array<i64: 2>, scalar_prefetch = 0 : i64, scratch_operands = 0 : i64, tpu.core_type = #tpu.core_type<tc>, window_params = [{transform_indices = @transform_0, window_bounds = array<i64: 108, 512>}, {pipeline_mode = #tpu.pipeline_mode<synchronous>, transform_indices = @transform_1, window_bounds = array<i64: 8, 108>}, {transform_indices = @transform_2, window_bounds = array<i64: 8, 512>}, {transform_indices = @transform_3, window_bounds = array<i64: 1, 8, 2>}]} {
    %c0 = arith.constant 0 : index
    %c0_0 = arith.constant 0 : index
    %0 = vector.load %arg2[%c0, %c0_0] : memref<8x108xf32, #tpu.memory_space<vmem>>, vector<8x108xf32>
    %c0_1 = arith.constant 0 : index
    %c0_2 = arith.constant 0 : index
    %1 = vector.load %arg1[%c0_1, %c0_2] : memref<108x512xf32, #tpu.memory_space<vmem>>, vector<108x512xf32>
    %cst = arith.constant dense<0.000000e+00> : vector<8x512xf32>
    %2 = tpu.matmul %0, %1, %cst {dimension_numbers = #tpu.dot_dimension_numbers<[1], [0], [0], [1], [0, 0, 1, 1], [], []>} : vector<8x108xf32>, vector<108x512xf32>, vector<8x512xf32> -> vector<8x512xf32>
    %c0_3 = arith.constant 0 : index
    %c0_4 = arith.constant 0 : index
    %3 = vector.load %arg3[%c0_3, %c0_4] : memref<8x512xf32, #tpu.memory_space<vmem>>, vector<8x512xf32>
    tpu.vector_store %arg3[%c0_3, %c0_4], %2 {strides = array<i32>} : memref<8x512xf32, #tpu.memory_space<vmem>>, vector<8x512xf32>,
    %cst_5 = arith.constant dense<0.000000e+00> : vector<8xf32>
    %4 = vector.multi_reduction <add>, %2, %cst_5 [1] : vector<8x512xf32> to vector<8xf32>
    %5 = vector.shape_cast %4 : vector<8xf32> to vector<8x1xf32>
    %6 = arith.mulf %2, %2 : vector<8x512xf32>
    %cst_6 = arith.constant dense<0.000000e+00> : vector<8xf32>
    %7 = vector.multi_reduction <add>, %6, %cst_6 [1] : vector<8x512xf32> to vector<8xf32>
    %8 = vector.shape_cast %7 : vector<8xf32> to vector<8x1xf32>
    %9 = tpu.concatenate %5, %8 in 1 : vector<8x1xf32>, vector<8x1xf32> -> vector<8x2xf32>
    %c0_7 = arith.constant 0 : index
    %c0_8 = arith.constant 0 : index
    %c0_9 = arith.constant 0 : index
    %10 = vector.load %arg4[%c0_7, %c0_8, %c0_9] : memref<1x8x2xf32, #tpu.memory_space<vmem>>, vector<1x8x2xf32>
    %11 = vector.shape_cast %10 : vector<1x8x2xf32> to vector<8x2xf32>
    %12 = vector.shape_cast %9 : vector<8x2xf32> to vector<1x8x2xf32>
    tpu.vector_store %arg4[%c0_7, %c0_8, %c0_9], %12 {strides = array<i32>} : memref<1x8x2xf32, #tpu.memory_space<vmem>>, vector<1x8x2xf32>,
    return
  }
  func.func @transform_0(%arg0: i32) -> (i32, i32) {
    %c0_i32 = arith.constant 0 : i32
    %c0_i32_0 = arith.constant 0 : i32
    return %c0_i32, %arg0 : i32, i32
  }
  func.func @transform_1(%arg0: i32) -> (i32, i32) {
    %c0_i32 = arith.constant 0 : i32
    %c0_i32_0 = arith.constant 0 : i32
    %c0_i32_1 = arith.constant 0 : i32
    return %c0_i32, %c0_i32_0 : i32, i32
  }
  func.func @transform_2(%arg0: i32) -> (i32, i32) {
    %c0_i32 = arith.constant 0 : i32
    %c0_i32_0 = arith.constant 0 : i32
    return %c0_i32, %arg0 : i32, i32
  }
  func.func @transform_3(%arg0: i32) -> (i32, i32, i32) {
    %c0_i32 = arith.constant 0 : i32
    %c0_i32_0 = arith.constant 0 : i32
    %c0_i32_1 = arith.constant 0 : i32
    return %arg0, %c0_i32, %c0_i32_0 : i32, i32, i32
  }
}

module attributes {stable_mosaic.version = 11 : i64} {
  func.func @_bn_relu_kernel(%arg0: i32, %arg1: memref<8x512xf32, #tpu.memory_space<vmem>>, %arg2: memref<8x2xf32, #tpu.memory_space<vmem>>, %arg3: memref<8x512xf32, #tpu.memory_space<vmem>>) attributes {dimension_semantics = [#tpu.dimension_semantics<parallel>], iteration_bounds = array<i64: 2>, scalar_prefetch = 0 : i64, scratch_operands = 0 : i64, tpu.core_type = #tpu.core_type<tc>, window_params = [{transform_indices = @transform_0, window_bounds = array<i64: 8, 512>}, {pipeline_mode = #tpu.pipeline_mode<synchronous>, transform_indices = @transform_1, window_bounds = array<i64: 8, 2>}, {transform_indices = @transform_2, window_bounds = array<i64: 8, 512>}]} {
    %c0 = arith.constant 0 : index
    %c0_0 = arith.constant 0 : index
    %0 = vector.load %arg2[%c0, %c0_0] : memref<8x2xf32, #tpu.memory_space<vmem>>, vector<8x1xf32>
    %c0_1 = arith.constant 0 : index
    %c1 = arith.constant 1 : index
    %1 = vector.load %arg2[%c0_1, %c1] : memref<8x2xf32, #tpu.memory_space<vmem>>, vector<8x1xf32>
    %c0_2 = arith.constant 0 : index
    %c0_3 = arith.constant 0 : index
    %2 = vector.load %arg1[%c0_2, %c0_3] : memref<8x512xf32, #tpu.memory_space<vmem>>, vector<8x512xf32>
    %3 = vector.broadcast %0 : vector<8x1xf32> to vector<8x512xf32>
    %4 = arith.mulf %2, %3 : vector<8x512xf32>
    %5 = vector.broadcast %1 : vector<8x1xf32> to vector<8x512xf32>
    %6 = arith.addf %4, %5 : vector<8x512xf32>
    %cst = arith.constant 0.000000e+00 : f32
    %7 = vector.broadcast %cst : f32 to vector<8x512xf32>
    %8 = arith.maximumf %6, %7 : vector<8x512xf32>
    %c0_4 = arith.constant 0 : index
    %c0_5 = arith.constant 0 : index
    %9 = vector.load %arg3[%c0_4, %c0_5] : memref<8x512xf32, #tpu.memory_space<vmem>>, vector<8x512xf32>
    tpu.vector_store %arg3[%c0_4, %c0_5], %8 {strides = array<i32>} : memref<8x512xf32, #tpu.memory_space<vmem>>, vector<8x512xf32>,
    return
  }
  func.func @transform_0(%arg0: i32) -> (i32, i32) {
    %c0_i32 = arith.constant 0 : i32
    %c0_i32_0 = arith.constant 0 : i32
    return %c0_i32, %arg0 : i32, i32
  }
  func.func @transform_1(%arg0: i32) -> (i32, i32) {
    %c0_i32 = arith.constant 0 : i32
    %c0_i32_0 = arith.constant 0 : i32
    %c0_i32_1 = arith.constant 0 : i32
    return %c0_i32, %c0_i32_0 : i32, i32
  }
  func.func @transform_2(%arg0: i32) -> (i32, i32) {
    %c0_i32 = arith.constant 0 : i32
    %c0_i32_0 = arith.constant 0 : i32
    return %c0_i32, %arg0 : i32, i32
  }
}

</mosaic_0001>

<llo_original>
// kernel: luconv_forward.2
$region0: #{luconv_forward.2}
  #allocation0 [shape = 'u32[]', space=smem, size = 0x4, offset = 0x4, fixed_abs, tag = 'smem constant byte address 0x4 - core index']
  #allocation1 [shape = 'u32[144,128]{1,0:T(1,128)}', space=vmem, size = 0x12000, scoped, tag = 'internal scratch']
  %s0 = inlined_call_operand.vmem [shape: f32[108,1024], index: 0, kind: input, shape index: {}]
  %s1 = inlined_call_operand.vmem [shape: f32[8,108], index: 1, kind: input, shape index: {}]
  %s2 = inlined_call_operand.vmem [shape: f32[8,1024], index: 2, kind: output, shape index: {0}]
  %s3 = inlined_call_operand.vmem [shape: f32[2,8,2], index: 3, kind: output, shape index: {1}]
  %4 = xla_tuple %s2, %s3
  %s5 = sld [smem:[#allocation0]]
  $region72: #{luconv_forward.2} parent=0
    _
  %s7 = ssub.s32 1, %s5
  %s8 = scalar_select 0, %s7, %s5
  $region1: #{luconv_forward.2} parent=0
    #allocation2 [shape = 'u8[458752]{0}', space=vmem, size = 0x70000, scoped, tag = 'input window, operand 0']
    loop: start=0, step=1, limit=4
    $region2: #{luconv_forward.2} parent=1 // loop_pre_header
      _
    $region3: #{luconv_forward.2} parent=1 // loop_header
      %s10 = sphi 0, %s14
      %p11 = scmp.ge.s32.totalorder %s10, 4
      %s20 = sphi 0, %s22
      %s23 = sphi 0, %s20
      %s24 = sphi 0, %s23
      %s40 = sphi 0, %s24
      %s44 = sphi 0, %s44
      %s46 = sphi 0, %s44
      %s47 = sphi 0, %s46
      %s61 = sphi 0, %s47
      %s67 = sphi 0, %s69
      %s70 = sphi 0, %s67
      %s71 = sphi 0, %s70
      %s87 = sphi 0, %s71
      %s93 = sphi 0, %s95
      %s96 = sphi 0, %s93
      %s97 = sphi 0, %s96
      %s113 = sphi 0, %s97
    $region4: #{luconv_forward.2} parent=1 // loop_header_branch
      %13 = sbr.rel (%p11) target = $region8
    $region5: #{luconv_forward.2} parent=1 // loop_body
      %s15 = ssub.s32 %s10, 1
      %s16 = ssub.s32 %s10, 2
      %s17 = sadd.s32 %s10, 1
      %s18 = ssub.s32 %s10, %s17
      %p19 = scmp.eq.s32.totalorder %s18, 0
      %s21 = sadd.s32 %s20, 1
      %s22 = scalar_select %p19, %s20, %s21
      %p25 = pneg %p19
      %p26 = scmp.eq.s32.totalorder %s10, 1
      %p27 = por %p25, %p26
      %p28 = scmp.ne.s32.totalorder %s20, %s23
      %p29 = scmp.eq.s32.totalorder %s10, 0
      %p30 = por %p28, %p29
      %p31 = scmp.ne.s32.totalorder %s20, %s23
      %p32 = scmp.eq.s32.totalorder %s15, 1
      %p33 = por %p31, %p32
      %p34 = scmp.ne.s32.totalorder %s23, %s24
      %p35 = scmp.eq.s32.totalorder %s15, 0
      %p36 = por %p34, %p35
      %p37 = scmp.ne.s32.totalorder %s23, %s24
      %p38 = scmp.eq.s32.totalorder %s16, 1
      %p39 = por %p37, %p38
      %p41 = scmp.ne.s32.totalorder %s24, %s40
      %p42 = scmp.eq.s32.totalorder %s16, 0
      %p43 = por %p41, %p42
      %s45 = sadd.s32 %s44, 1
      %p48 = scmp.eq.s32.totalorder %s10, 1
      %p49 = scmp.ne.s32.totalorder %s44, %s46
      %p50 = scmp.eq.s32.totalorder %s10, 0
      %p51 = por %p49, %p50
      %p52 = scmp.ne.s32.totalorder %s44, %s46
      %p53 = scmp.eq.s32.totalorder %s15, 1
      %p54 = por %p52, %p53
      %p55 = scmp.ne.s32.totalorder %s46, %s47
      %p56 = scmp.eq.s32.totalorder %s15, 0
      %p57 = por %p55, %p56
      %p58 = scmp.ne.s32.totalorder %s46, %s47
      %p59 = scmp.eq.s32.totalorder %s16, 1
      %p60 = por %p58, %p59
      %p62 = scmp.ne.s32.totalorder %s47, %s61
      %p63 = scmp.eq.s32.totalorder %s16, 0
      %p64 = por %p62, %p63
      %s65 = ssub.s32 %s10, %s17
      %p66 = scmp.eq.s32.totalorder %s65, 0
      %s68 = sadd.s32 %s67, 1
      %s69 = scalar_select %p66, %s67, %s68
      %p72 = pneg %p66
      %p73 = scmp.eq.s32.totalorder %s10, 1
      %p74 = por %p72, %p73
      %p75 = scmp.ne.s32.totalorder %s67, %s70
      %p76 = scmp.eq.s32.totalorder %s10, 0
      %p77 = por %p75, %p76
      %p78 = scmp.ne.s32.totalorder %s67, %s70
      %p79 = scmp.eq.s32.totalorder %s15, 1
      %p80 = por %p78, %p79
      %p81 = scmp.ne.s32.totalorder %s70, %s71
      %p82 = scmp.eq.s32.totalorder %s15, 0
      %p83 = por %p81, %p82
      %p84 = scmp.ne.s32.totalorder %s70, %s71
      %p85 = scmp.eq.s32.totalorder %s16, 1
      %p86 = por %p84, %p85
      %p88 = scmp.ne.s32.totalorder %s71, %s87
      %p89 = scmp.eq.s32.totalorder %s16, 0
      %p90 = por %p88, %p89
      %s91 = ssub.s32 %s10, %s17
      %p92 = scmp.eq.s32.totalorder %s91, 0
      %s94 = sadd.s32 %s93, 1
      %s95 = scalar_select %p92, %s93, %s94
      %p98 = pneg %p92
      %p99 = scmp.eq.s32.totalorder %s10, 1
      %p100 = por %p98, %p99
      %p101 = scmp.ne.s32.totalorder %s93, %s96
      %p102 = scmp.eq.s32.totalorder %s10, 0
      %p103 = por %p101, %p102
      %p104 = scmp.ne.s32.totalorder %s93, %s96
      %p105 = scmp.eq.s32.totalorder %s15, 1
      %p106 = por %p104, %p105
      %p107 = scmp.ne.s32.totalorder %s96, %s97
      %p108 = scmp.eq.s32.totalorder %s15, 0
      %p109 = por %p107, %p108
      %p110 = scmp.ne.s32.totalorder %s96, %s97
      %p111 = scmp.eq.s32.totalorder %s16, 1
      %p112 = por %p110, %p111
      %p114 = scmp.ne.s32.totalorder %s97, %s113
      %p115 = scmp.eq.s32.totalorder %s16, 0
      %p116 = por %p114, %p115
      %p117 = scmp.le.s32.totalorder 1, %s10
      %p118 = scmp.lt.s32.totalorder %s10, 3
      %p119 = pnand %p117, %p118
      %p120 = pneg %p119
      // Predicated region
      $region9: #{luconv_forward.2} parent=5 // pred_check
        _
      $region10: #{luconv_forward.2} parent=5 // pred_check_branch
        %122 = sbr.rel (%p119) target = $region12
      $region11: #{luconv_forward.2} parent=5 // pred_region
        %s123 = ssub.s32 %s10, 1
        // Predicated region
        $region13: #{luconv_forward.2} parent=11 // pred_check
          %p124 = pneg %p57
        $region14: #{luconv_forward.2} parent=11 // pred_check_branch
          %126 = sbr.rel (%p124) target = $region16
        $region15: #{luconv_forward.2} parent=11 // pred_region
          _
        $region16: #{luconv_forward.2} parent=11 // pred_fallthru
          _
      $region12: #{luconv_forward.2} parent=5 // pred_fallthru
        _
      %p127 = scmp.lt.s32.totalorder %s10, 2
      // Predicated region
      $region17: #{luconv_forward.2} parent=5 // pred_check
        %p128 = pneg %p127
      $region18: #{luconv_forward.2} parent=5 // pred_check_branch
        %130 = sbr.rel (%p128) target = $region20
      $region19: #{luconv_forward.2} parent=5 // pred_region
        // Predicated region
        $region21: #{luconv_forward.2} parent=19 // pred_check
          %p131 = pneg %p30
        $region22: #{luconv_forward.2} parent=19 // pred_check_branch
          %133 = sbr.rel (%p131) target = $region24
        $region23: #{luconv_forward.2} parent=19 // pred_region
          %s134 = sand.u32 %s20, 1
          %s135 = sand.u32 %s20, 1
          %s136 = smul.addr %s135, 448
          %s137 = scalar_lea.vmem [#allocation2], %s136
          %s138 = smul.u32 4, %s10
          %s139 = smul.addr %s138, 8
          %s140 = scalar_lea.vmem %s0, %s139
          // Predicated region
          $region25: #{luconv_forward.2} parent=23 // pred_check
            _
          $region26: #{luconv_forward.2} parent=23 // pred_check_branch
            %142 = sbr.rel (0) target = $region28
          $region27: #{luconv_forward.2} parent=23 // pred_region
            // Predicated region
            $region29: #{luconv_forward.2} parent=27 // pred_check
              _
            $region30: #{luconv_forward.2} parent=27 // pred_check_branch
              %144 = sbr.rel (0) target = $region32
            $region31: #{luconv_forward.2} parent=27 // pred_region
              loop: start=0, step=1, limit=1
              $region33: #{luconv_forward.2} parent=31 // loop_pre_header
                _
              $region34: #{luconv_forward.2} parent=31 // loop_header
                %s146 = sphi 0, %s150
                %p147 = scmp.ge.s32.totalorder %s146, 1
                %s151 = sphi %s140, %s140
                %s152 = sphi %s137, %s137
              $region35: #{luconv_forward.2} parent=31 // loop_header_branch
                %149 = sbr.rel (%p147) target = $region39
              $region36: #{luconv_forward.2} parent=31 // loop_body
                %v153 = vld [vmem:[%s151] sm:$0xff]
                %154 = vst [vmem:[%s152] sm:$0xff] %v153
                %v155 = vld [vmem:[%s151 + $0x8] sm:$0xff]
                %156 = vst [vmem:[%s152 + $0x8] sm:$0xff] %v155
                %v157 = vld [vmem:[%s151 + $0x10] sm:$0xff]
                %158 = vst [vmem:[%s152 + $0x10] sm:$0xff] %v157
                %v159 = vld [vmem:[%s151 + $0x18] sm:$0xff]
                %160 = vst [vmem:[%s152 + $0x18] sm:$0xff] %v159
                %v161 = vld [vmem:[%s151 + $0x40] sm:$0xff]
                %162 = vst [vmem:[%s152 + $0x20] sm:$0xff] %v161
                %v163 = vld [vmem:[%s151 + $0x48] sm:$0xff]
                %164 = vst [vmem:[%s152 + $0x28] sm:$0xff] %v163
                %v165 = vld [vmem:[%s151 + $0x50] sm:$0xff]
                %166 = vst [vmem:[%s152 + $0x30] sm:$0xff] %v165
                %v167 = vld [vmem:[%s151 + $0x58] sm:$0xff]
                %168 = vst [vmem:[%s152 + $0x38] sm:$0xff] %v167
                %v169 = vld [vmem:[%s151 + $0x80] sm:$0xff]
                %170 = vst [vmem:[%s152 + $0x40] sm:$0xff] %v169
                %v171 = vld [vmem:[%s151 + $0x88] sm:$0xff]
                %172 = vst [vmem:[%s152 + $0x48] sm:$0xff] %v171
                %v173 = vld [vmem:[%s151 + $0x90] sm:$0xff]
                %174 = vst [vmem:[%s152 + $0x50] sm:$0xff] %v173
                %v175 = vld [vmem:[%s151 + $0x98] sm:$0xff]
                %176 = vst [vmem:[%s152 + $0x58] sm:$0xff] %v175
                %v177 = vld [vmem:[%s151 + $0xc0] sm:$0xff]
                %178 = vst [vmem:[%s152 + $0x60] sm:$0xff] %v177
                %v179 = vld [vmem:[%s151 + $0xc8] sm:$0xff]
                %180 = vst [vmem:[%s152 + $0x68] sm:$0xff] %v179
                %v181 = vld [vmem:[%s151 + $0xd0] sm:$0xff]
                %182 = vst [vmem:[%s152 + $0x70] sm:$0xff] %v181
                %v183 = vld [vmem:[%s151 + $0xd8] sm:$0xff]
                %184 = vst [vmem:[%s152 + $0x78] sm:$0xff] %v183
                %v185 = vld [vmem:[%s151 + $0x100] sm:$0xff]
                %186 = vst [vmem:[%s152 + $0x80] sm:$0xff] %v185
                %v187 = vld [vmem:[%s151 + $0x108] sm:$0xff]
                %188 = vst [vmem:[%s152 + $0x88] sm:$0xff] %v187
                %v189 = vld [vmem:[%s151 + $0x110] sm:$0xff]
                %190 = vst [vmem:[%s152 + $0x90] sm:$0xff] %v189
                %v191 = vld [vmem:[%s151 + $0x118] sm:$0xff]
                %192 = vst [vmem:[%s152 + $0x98] sm:$0xff] %v191
                %v193 = vld [vmem:[%s151 + $0x140] sm:$0xff]
                %194 = vst [vmem:[%s152 + $0xa0] sm:$0xff] %v193
                %v195 = vld [vmem:[%s151 + $0x148] sm:$0xff]
                %196 = vst [vmem:[%s152 + $0xa8] sm:$0xff] %v195
                %v197 = vld [vmem:[%s151 + $0x150] sm:$0xff]
                %198 = vst [vmem:[%s152 + $0xb0] sm:$0xff] %v197
                %v199 = vld [vmem:[%s151 + $0x158] sm:$0xff]
                %200 = vst [vmem:[%s152 + $0xb8] sm:$0xff] %v199
                %v201 = vld [vmem:[%s151 + $0x180] sm:$0xff]
                %202 = vst [vmem:[%s152 + $0xc0] sm:$0xff] %v201
                %v203 = vld [vmem:[%s151 + $0x188] sm:$0xff]
                %204 = vst [vmem:[%s152 + $0xc8] sm:$0xff] %v203
                %v205 = vld [vmem:[%s151 + $0x190] sm:$0xff]
                %206 = vst [vmem:[%s152 + $0xd0] sm:$0xff] %v205
                %v207 = vld [vmem:[%s151 + $0x198] sm:$0xff]
                %208 = vst [vmem:[%s152 + $0xd8] sm:$0xff] %v207
                %v209 = vld [vmem:[%s151 + $0x1c0] sm:$0xff]
                %210 = vst [vmem:[%s152 + $0xe0] sm:$0xff] %v209
                %v211 = vld [vmem:[%s151 + $0x1c8] sm:$0xff]
                %212 = vst [vmem:[%s152 + $0xe8] sm:$0xff] %v211
                %v213 = vld [vmem:[%s151 + $0x1d0] sm:$0xff]
                %214 = vst [vmem:[%s152 + $0xf0] sm:$0xff] %v213
                %v215 = vld [vmem:[%s151 + $0x1d8] sm:$0xff]
                %216 = vst [vmem:[%s152 + $0xf8] sm:$0xff] %v215
                %v217 = vld [vmem:[%s151 + $0x200] sm:$0xff]
                %218 = vst [vmem:[%s152 + $0x100] sm:$0xff] %v217
                %v219 = vld [vmem:[%s151 + $0x208] sm:$0xff]
                %220 = vst [vmem:[%s152 + $0x108] sm:$0xff] %v219
                %v221 = vld [vmem:[%s151 + $0x210] sm:$0xff]
                %222 = vst [vmem:[%s152 + $0x110] sm:$0xff] %v221
                %v223 = vld [vmem:[%s151 + $0x218] sm:$0xff]
                %224 = vst [vmem:[%s152 + $0x118] sm:$0xff] %v223
                %v225 = vld [vmem:[%s151 + $0x240] sm:$0xff]
                %226 = vst [vmem:[%s152 + $0x120] sm:$0xff] %v225
                %v227 = vld [vmem:[%s151 + $0x248] sm:$0xff]
                %228 = vst [vmem:[%s152 + $0x128] sm:$0xff] %v227
                %v229 = vld [vmem:[%s151 + $0x250] sm:$0xff]
                %230 = vst [vmem:[%s152 + $0x130] sm:$0xff] %v229
                %v231 = vld [vmem:[%s151 + $0x258] sm:$0xff]
                %232 = vst [vmem:[%s152 + $0x138] sm:$0xff] %v231
                %v233 = vld [vmem:[%s151 + $0x280] sm:$0xff]
                %234 = vst [vmem:[%s152 + $0x140] sm:$0xff] %v233
                %v235 = vld [vmem:[%s151 + $0x288] sm:$0xff]
                %236 = vst [vmem:[%s152 + $0x148] sm:$0xff] %v235
                %v237 = vld [vmem:[%s151 + $0x290] sm:$0xff]
                %238 = vst [vmem:[%s152 + $0x150] sm:$0xff] %v237
                %v239 = vld [vmem:[%s151 + $0x298] sm:$0xff]
                %240 = vst [vmem:[%s152 + $0x158] sm:$0xff] %v239
                %v241 = vld [vmem:[%s151 + $0x2c0] sm:$0xff]
                %242 = vst [vmem:[%s152 + $0x160] sm:$0xff] %v241
                %v243 = vld [vmem:[%s151 + $0x2c8] sm:$0xff]
                %244 = vst [vmem:[%s152 + $0x168] sm:$0xff] %v243
                %v245 = vld [vmem:[%s151 + $0x2d0] sm:$0xff]
                %246 = vst [vmem:[%s152 + $0x170] sm:$0xff] %v245
                %v247 = vld [vmem:[%s151 + $0x2d8] sm:$0xff]
                %248 = vst [vmem:[%s152 + $0x178] sm:$0xff] %v247
                %v249 = vld [vmem:[%s151 + $0x300] sm:$0xff]
                %250 = vst [vmem:[%s152 + $0x180] sm:$0xff] %v249
                %v251 = vld [vmem:[%s151 + $0x308] sm:$0xff]
                %252 = vst [vmem:[%s152 + $0x188] sm:$0xff] %v251
                %v253 = vld [vmem:[%s151 + $0x310] sm:$0xff]
                %254 = vst [vmem:[%s152 + $0x190] sm:$0xff] %v253
                %v255 = vld [vmem:[%s151 + $0x318] sm:$0xff]
                %256 = vst [vmem:[%s152 + $0x198] sm:$0xff] %v255
                %v257 = vld [vmem:[%s151 + $0x340] sm:$0xff]
                %258 = vst [vmem:[%s152 + $0x1a0] sm:$0xff] %v257
                %v259 = vld [vmem:[%s151 + $0x348] sm:$0xff]
                %260 = vst [vmem:[%s152 + $0x1a8] sm:$0xff] %v259
                %v261 = vld [vmem:[%s151 + $0x350] sm:$0xff]
                %262 = vst [vmem:[%s152 + $0x1b0] sm:$0xff] %v261
                %v263 = vld [vmem:[%s151 + $0x358] sm:$0xff]
                %264 = vst [vmem:[%s152 + $0x1b8] sm:$0xff] %v263
              $region37: #{luconv_forward.2} parent=31 // loop_footer
                %s150 = sadd.s32 1, %s146
              $region38: #{luconv_forward.2} parent=31 // loop_footer_branch
                %145 = sbr.rel target = $region34
              $region39: #{luconv_forward.2} parent=31 // loop_exit
                _
            $region32: #{luconv_forward.2} parent=27 // pred_fallthru
              _
            // Predicated region
            $region40: #{luconv_forward.2} parent=27 // pred_check
              _
            $region41: #{luconv_forward.2} parent=27 // pred_check_branch
              %266 = sbr.rel target = $region43
            $region42: #{luconv_forward.2} parent=27 // pred_region
              _
            $region43: #{luconv_forward.2} parent=27 // pred_fallthru
              _
          $region28: #{luconv_forward.2} parent=23 // pred_fallthru
            _
          %267 = vnop
        $region24: #{luconv_forward.2} parent=19 // pred_fallthru
          _
      $region20: #{luconv_forward.2} parent=5 // pred_fallthru
        _
      %p268 = scmp.le.s32.totalorder 1, %s10
      %p269 = scmp.lt.s32.totalorder %s10, 3
      %p270 = pnand %p268, %p269
      %p271 = pneg %p270
      // Predicated region
      $region44: #{luconv_forward.2} parent=5 // pred_check
        _
      $region45: #{luconv_forward.2} parent=5 // pred_check_branch
        %273 = sbr.rel (%p270) target = $region47
      $region46: #{luconv_forward.2} parent=5 // pred_region
        %s274 = ssub.s32 %s10, 1
        %s275 = sand.u32 %s23, 1
        %s276 = sand.u32 %s23, 1
        %s277 = smul.addr %s276, 448
        %s278 = scalar_lea.vmem [#allocation2], %s277
        // Predicated region
        $region48: #{luconv_forward.2} parent=46 // pred_check
          %p279 = pneg %p36
        $region49: #{luconv_forward.2} parent=46 // pred_check_branch
          %281 = sbr.rel (%p279) target = $region51
        $region50: #{luconv_forward.2} parent=46 // pred_region
          _
        $region51: #{luconv_forward.2} parent=46 // pred_fallthru
          _
        %s282 = sand.u32 %s23, 1
        %s283 = sand.u32 %s23, 1
        %s284 = smul.addr %s283, 448
        %s285 = scalar_lea.vmem [#allocation2], %s284
        %p286 = pneg %p36
        %p287 = pneg %p33
        %p288 = pneg %p57
        %p289 = pneg %p54
        %p290 = pneg %p83
        %p291 = pneg %p80
        %s292 = smul.u32 4, %s15
        %p293 = scmp.lt.s32.totalorder %s292, 7
        %s294 = scalar_select %p293, %s292, 7
        %s295 = smul.addr %s294, 8
        %s296 = scalar_lea.vmem %s2, %s295
        %p297 = pneg %p109
        %p298 = pneg %p106
        %p299 = scmp.lt.s32.totalorder %s15, 1
        %s300 = scalar_select %p299, %s15, 1
        %s301 = smul.addr %s300, 8
        %s302 = scalar_lea.vmem %s3, %s301
        %s303 = smul.u32 4, %s15
        %s304 = smul.u32 4, %s15
        %p305 = scmp.lt.s32.totalorder %s304, 7
        %s306 = scalar_select %p305, %s304, 7
        %s307 = smul.addr %s306, 8
        %s308 = scalar_lea.vmem %s2, %s307
        %s309 = smul.u32 4, %s15
        %p310 = scmp.lt.s32.totalorder %s15, 1
        %s311 = scalar_select %p310, %s15, 1
        %s312 = smul.addr %s311, 8
        %s313 = scalar_lea.vmem %s3, %s312
        %v314 = vld [vmem:[%s1] sm:$0xff]
        %v315 = vld [vmem:[%s278] sm:$0xff]
        %v316 = vld [vmem:[%s278 + $0x8] sm:$0xff]
        %v317 = vld [vmem:[%s278 + $0x10] sm:$0xff]
        %v318 = vld [vmem:[%s278 + $0x18] sm:$0xff]
        %v319 = vld [vmem:[%s278 + $0x20] sm:$0xff]
        %v320 = vld [vmem:[%s278 + $0x28] sm:$0xff]
        %v321 = vld [vmem:[%s278 + $0x30] sm:$0xff]
        %v322 = vld [vmem:[%s278 + $0x38] sm:$0xff]
        %v323 = vld [vmem:[%s278 + $0x40] sm:$0xff]
        %v324 = vld [vmem:[%s278 + $0x48] sm:$0xff]
        %v325 = vld [vmem:[%s278 + $0x50] sm:$0xff]
        %v326 = vld [vmem:[%s278 + $0x58] sm:$0xff]
        %v327 = vld [vmem:[%s278 + $0x60] sm:$0xff]
        %v328 = vld [vmem:[%s278 + $0x68] sm:$0xff]
        %v329 = vld [vmem:[%s278 + $0x70] sm:$0xff]
        %v330 = vld [vmem:[%s278 + $0x78] sm:$0xff]
        %v331 = vld [vmem:[%s278 + $0x80] sm:$0xff]
        %v332 = vld [vmem:[%s278 + $0x88] sm:$0xff]
        %v333 = vld [vmem:[%s278 + $0x90] sm:$0xff]
        %v334 = vld [vmem:[%s278 + $0x98] sm:$0xff]
        %v335 = vld [vmem:[%s278 + $0xa0] sm:$0xff]
        %v336 = vld [vmem:[%s278 + $0xa8] sm:$0xff]
        %v337 = vld [vmem:[%s278 + $0xb0] sm:$0xff]
        %v338 = vld [vmem:[%s278 + $0xb8] sm:$0xff]
        %v339 = vld [vmem:[%s278 + $0xc0] sm:$0xff]
        %v340 = vld [vmem:[%s278 + $0xc8] sm:$0xff]
        %v341 = vld [vmem:[%s278 + $0xd0] sm:$0xff]
        %v342 = vld [vmem:[%s278 + $0xd8] sm:$0xff]
        %v343 = vld [vmem:[%s278 + $0xe0] sm:$0xff]
        %v344 = vld [vmem:[%s278 + $0xe8] sm:$0xff]
        %v345 = vld [vmem:[%s278 + $0xf0] sm:$0xff]
        %v346 = vld [vmem:[%s278 + $0xf8] sm:$0xff]
        %v347 = vld [vmem:[%s278 + $0x100] sm:$0xff]
        %v348 = vld [vmem:[%s278 + $0x108] sm:$0xff]
        %v349 = vld [vmem:[%s278 + $0x110] sm:$0xff]
        %v350 = vld [vmem:[%s278 + $0x118] sm:$0xff]
        %v351 = vld [vmem:[%s278 + $0x120] sm:$0xff]
        %v352 = vld [vmem:[%s278 + $0x128] sm:$0xff]
        %v353 = vld [vmem:[%s278 + $0x130] sm:$0xff]
        %v354 = vld [vmem:[%s278 + $0x138] sm:$0xff]
        %v355 = vld [vmem:[%s278 + $0x140] sm:$0xff]
        %v356 = vld [vmem:[%s278 + $0x148] sm:$0xff]
        %v357 = vld [vmem:[%s278 + $0x150] sm:$0xff]
        %v358 = vld [vmem:[%s278 + $0x158] sm:$0xff]
        %v359 = vld [vmem:[%s278 + $0x160] sm:$0xff]
        %v360 = vld [vmem:[%s278 + $0x168] sm:$0xff]
        %v361 = vld [vmem:[%s278 + $0x170] sm:$0xff]
        %v362 = vld [vmem:[%s278 + $0x178] sm:$0xff]
        %v363 = vld [vmem:[%s278 + $0x180] sm:$0xff]
        %v364 = vld [vmem:[%s278 + $0x188] sm:$0xff]
        %v365 = vld [vmem:[%s278 + $0x190] sm:$0xff]
        %v366 = vld [vmem:[%s278 + $0x198] sm:$0xff]
        %v367 = vld [vmem:[%s278 + $0x1a0] sm:$0xf]
        %v368 = vld [vmem:[%s278 + $0x1a8] sm:$0xf]
        %v369 = vld [vmem:[%s278 + $0x1b0] sm:$0xf]
        %v370 = vld [vmem:[%s278 + $0x1b8] sm:$0xf]
        %vm371 = vcmask 883712
        %v373 = vsel %vm371, %v314, 0
        %vm375 = vcmask 1043456
        %v377 = vsel %vm375, %v367, 0
        %v380 = vsel %vm375, %v368, 0
        %v383 = vsel %vm375, %v369, 0
        %v386 = vsel %vm375, %v370, 0
        %388 = vmatprep.subr.mxu0 0.0
        %389 = vmatpush1.msra.mxu0 0.0
        %390 = vmatprep.subr.mxu0 0.0
        %391 = vmatpush1.msra.mxu0 0.0
        %392 = vmatprep.subr.mxu0 %v380
        %393 = vmatpush1.msra.mxu0 %v377
        %394 = vmatprep.subr.mxu0 %v364
        %395 = vmatpush1.msra.mxu0 %v363
        %396 = vmatprep.subr.mxu0 %v360
        %397 = vmatpush1.msra.mxu0 %v359
        %398 = vmatprep.subr.mxu0 %v356
        %399 = vmatpush1.msra.mxu0 %v355
        %400 = vmatprep.subr.mxu0 %v352
        %401 = vmatpush1.msra.mxu0 %v351
        %402 = vmatprep.subr.mxu0 %v348
        %403 = vmatpush1.msra.mxu0 %v347
        %404 = vmatprep.subr.mxu0 %v344
        %405 = vmatpush1.msra.mxu0 %v343
        %406 = vmatprep.subr.mxu0 %v340
        %407 = vmatpush1.msra.mxu0 %v339
        %408 = vmatprep.subr.mxu0 %v336
        %409 = vmatpush1.msra.mxu0 %v335
        %410 = vmatprep.subr.mxu0 %v332
        %411 = vmatpush1.msra.mxu0 %v331
        %412 = vmatprep.subr.mxu0 %v328
        %413 = vmatpush1.msra.mxu0 %v327
        %414 = vmatprep.subr.mxu0 %v324
        %415 = vmatpush1.msra.mxu0 %v323
        %416 = vmatprep.subr.mxu0 %v320
        %417 = vmatpush1.msra.mxu0 %v319
        %418 = vmatprep.subr.mxu0 %v316
        %419 = vmatpush1.msra.mxu0 %v315
        %420 = vmatprep.subr.mxu0 0.0
        %421 = vmatpush2.msra.mxu0 0.0
        %422 = vmatprep.subr.mxu0 0.0
        %423 = vmatpush2.msra.mxu0 0.0
        %424 = vmatprep.subr.mxu0 0.0
        %425 = vmatpush2.msra.mxu0 0.0
        %426 = vmatprep.subr.mxu0 0.0
        %427 = vmatpush2.msra.mxu0 0.0
        %428 = vmatprep.subr.mxu0 0.0
        %429 = vmatpush2.msra.mxu0 0.0
        %430 = vmatprep.subr.mxu0 0.0
        %431 = vmatpush2.msra.mxu0 0.0
        %432 = vmatprep.subr.mxu0 0.0
        %433 = vmatpush2.msra.mxu0 0.0
        %434 = vmatprep.subr.mxu0 0.0
        %435 = vmatpush2.msra.mxu0 0.0
        %436 = vmatprep.subr.mxu0 0.0
        %437 = vmatpush2.msra.mxu0 0.0
        %438 = vmatprep.subr.mxu0 0.0
        %439 = vmatpush2.msra.mxu0 0.0
        %440 = vmatprep.subr.mxu0 0.0
        %441 = vmatpush2.msra.mxu0 0.0
        %442 = vmatprep.subr.mxu0 0.0
        %443 = vmatpush2.msra.mxu0 0.0
        %444 = vmatprep.subr.mxu0 0.0
        %445 = vmatpush2.msra.mxu0 0.0
        %446 = vmatprep.subr.mxu0 0.0
        %447 = vmatpush2.msra.mxu0 0.0
        %448 = vmatprep.subr.mxu0 0.0
        %449 = vmatpush2.msra.mxu0 0.0
        %450 = vmatprep.subr.mxu0 0.0
        %451 = vmatpush2.msra.mxu0 0.0
        %452 = vmatprep.mubr.f32.mxu0 0.0
        %453 = vmatmul.mubr.f32.gmra.mxu0 %v373
        %v454 = vpop.f32.mrf.mxu0
        %v455 = vadd.f32 0.0, %v454
        %v456 = vpop.f32.mrf.mxu0
        %v457 = vadd.f32 0.0, %v456
        %458 = vdwg.mxu0
        %459 = vmatprep.subr.mxu0 0.0
        %460 = vmatpush1.msra.mxu0 0.0
        %461 = vmatprep.subr.mxu0 0.0
        %462 = vmatpush1.msra.mxu0 0.0
        %463 = vmatprep.subr.mxu0 %v386
        %464 = vmatpush1.msra.mxu0 %v383
        %465 = vmatprep.subr.mxu0 %v366
        %466 = vmatpush1.msra.mxu0 %v365
        %467 = vmatprep.subr.mxu0 %v362
        %468 = vmatpush1.msra.mxu0 %v361
        %469 = vmatprep.subr.mxu0 %v358
        %470 = vmatpush1.msra.mxu0 %v357
        %471 = vmatprep.subr.mxu0 %v354
        %472 = vmatpush1.msra.mxu0 %v353
        %473 = vmatprep.subr.mxu0 %v350
        %474 = vmatpush1.msra.mxu0 %v349
        %475 = vmatprep.subr.mxu0 %v346
        %476 = vmatpush1.msra.mxu0 %v345
        %477 = vmatprep.subr.mxu0 %v342
        %478 = vmatpush1.msra.mxu0 %v341
        %479 = vmatprep.subr.mxu0 %v338
        %480 = vmatpush1.msra.mxu0 %v337
        %481 = vmatprep.subr.mxu0 %v334
        %482 = vmatpush1.msra.mxu0 %v333
        %483 = vmatprep.subr.mxu0 %v330
        %484 = vmatpush1.msra.mxu0 %v329
        %485 = vmatprep.subr.mxu0 %v326
        %486 = vmatpush1.msra.mxu0 %v325
        %487 = vmatprep.subr.mxu0 %v322
        %488 = vmatpush1.msra.mxu0 %v321
        %489 = vmatprep.subr.mxu0 %v318
        %490 = vmatpush1.msra.mxu0 %v317
        %491 = vmatprep.subr.mxu0 0.0
        %492 = vmatpush2.msra.mxu0 0.0
        %493 = vmatprep.subr.mxu0 0.0
        %494 = vmatpush2.msra.mxu0 0.0
        %495 = vmatprep.subr.mxu0 0.0
        %496 = vmatpush2.msra.mxu0 0.0
        %497 = vmatprep.subr.mxu0 0.0
        %498 = vmatpush2.msra.mxu0 0.0
        %499 = vmatprep.subr.mxu0 0.0
        %500 = vmatpush2.msra.mxu0 0.0
        %501 = vmatprep.subr.mxu0 0.0
        %502 = vmatpush2.msra.mxu0 0.0
        %503 = vmatprep.subr.mxu0 0.0
        %504 = vmatpush2.msra.mxu0 0.0
        %505 = vmatprep.subr.mxu0 0.0
        %506 = vmatpush2.msra.mxu0 0.0
        %507 = vmatprep.subr.mxu0 0.0
        %508 = vmatpush2.msra.mxu0 0.0
        %509 = vmatprep.subr.mxu0 0.0
        %510 = vmatpush2.msra.mxu0 0.0
        %511 = vmatprep.subr.mxu0 0.0
        %512 = vmatpush2.msra.mxu0 0.0
        %513 = vmatprep.subr.mxu0 0.0
        %514 = vmatpush2.msra.mxu0 0.0
        %515 = vmatprep.subr.mxu0 0.0
        %516 = vmatpush2.msra.mxu0 0.0
        %517 = vmatprep.subr.mxu0 0.0
        %518 = vmatpush2.msra.mxu0 0.0
        %519 = vmatprep.subr.mxu0 0.0
        %520 = vmatpush2.msra.mxu0 0.0
        %521 = vmatprep.subr.mxu0 0.0
        %522 = vmatpush2.msra.mxu0 0.0
        %523 = vmatprep.mubr.f32.mxu0 0.0
        %524 = vmatmul.mubr.f32.gmra.mxu0 %v373
        %v525 = vpop.f32.mrf.mxu0
        %v526 = vadd.f32 0.0, %v525
        %v527 = vpop.f32.mrf.mxu0
        %v528 = vadd.f32 0.0, %v527
        %529 = vdwg.mxu0
        %530 = vst [vmem:[%s308] sm:$0xff] %v455
        %531 = vst [vmem:[%s308 + $0x8] sm:$0xff] %v457
        %532 = vst [vmem:[%s308 + $0x10] sm:$0xff] %v526
        %533 = vst [vmem:[%s308 + $0x18] sm:$0xff] %v528
        %v534 = vadd.f32 %v455, %v457
        %v535 = vadd.f32 %v534, %v526
        %v536 = vadd.f32 %v535, %v528
        %537 = vadd.xlane.f32.xlu0 %v536
        %v538 = vpop.xlane.xlu0 %537
        %v539 = vmul.f32 %v455, %v455
        %v540 = vmul.f32 %v457, %v457
        %v541 = vmul.f32 %v526, %v526
        %v542 = vmul.f32 %v528, %v528
        %v543 = vadd.f32 %v539, %v540
        %v544 = vadd.f32 %v543, %v541
        %v545 = vadd.f32 %v544, %v542
        %546 = vadd.xlane.f32.xlu0 %v545
        %v547 = vpop.xlane.xlu0 %546
        %vm548 = vcmask 7168
        %v549 = vsel %vm548, %v538, %v547
        %vm550 = vcmask 15360
        %551 = vst.msk [vmem:[%s313] sm:$0xff] %vm550, %v549
        %s552 = smul.u32 4, %s15
        %p553 = scmp.lt.s32.totalorder %s552, 7
        %s554 = scalar_select %p553, %s552, 7
        %s555 = smul.addr %s554, 8
        %s556 = scalar_lea.vmem %s2, %s555
        %p557 = scmp.lt.s32.totalorder %s15, 1
        %s558 = scalar_select %p557, %s15, 1
        %s559 = smul.addr %s558, 8
        %s560 = scalar_lea.vmem %s3, %s559
        // Predicated region
        $region52: #{luconv_forward.2} parent=46 // pred_check
          %p561 = pneg %p80
        $region53: #{luconv_forward.2} parent=46 // pred_check_branch
          %563 = sbr.rel (%p561) target = $region55
        $region54: #{luconv_forward.2} parent=46 // pred_region
          %s564 = smul.u32 4, %s15
        $region55: #{luconv_forward.2} parent=46 // pred_fallthru
          _
        // Predicated region
        $region56: #{luconv_forward.2} parent=46 // pred_check
          %p565 = pneg %p106
        $region57: #{luconv_forward.2} parent=46 // pred_check_branch
          %567 = sbr.rel (%p565) target = $region59
        $region58: #{luconv_forward.2} parent=46 // pred_region
          _
        $region59: #{luconv_forward.2} parent=46 // pred_fallthru
          _
      $region47: #{luconv_forward.2} parent=5 // pred_fallthru
        _
      %p568 = scmp.le.s32.totalorder 2, %s10
      // Predicated region
      $region60: #{luconv_forward.2} parent=5 // pred_check
        %p569 = pneg %p568
      $region61: #{luconv_forward.2} parent=5 // pred_check_branch
        %571 = sbr.rel (%p569) target = $region63
      $region62: #{luconv_forward.2} parent=5 // pred_region
        %s572 = ssub.s32 %s10, 2
        // Predicated region
        $region64: #{luconv_forward.2} parent=62 // pred_check
          %p573 = pneg %p86
        $region65: #{luconv_forward.2} parent=62 // pred_check_branch
          %575 = sbr.rel (%p573) target = $region67
        $region66: #{luconv_forward.2} parent=62 // pred_region
          %s576 = smul.u32 4, %s16
          %p577 = scmp.lt.s32.totalorder %s576, 7
          %s578 = scalar_select %p577, %s576, 7
          %s579 = smul.addr %s578, 8
          %s580 = scalar_lea.vmem %s2, %s579
        $region67: #{luconv_forward.2} parent=62 // pred_fallthru
          _
        // Predicated region
        $region68: #{luconv_forward.2} parent=62 // pred_check
          %p581 = pneg %p112
        $region69: #{luconv_forward.2} parent=62 // pred_check_branch
          %583 = sbr.rel (%p581) target = $region71
        $region70: #{luconv_forward.2} parent=62 // pred_region
          %p584 = scmp.lt.s32.totalorder %s16, 1
          %s585 = scalar_select %p584, %s16, 1
          %s586 = smul.addr %s585, 8
          %s587 = scalar_lea.vmem %s3, %s586
        $region71: #{luconv_forward.2} parent=62 // pred_fallthru
          _
      $region63: #{luconv_forward.2} parent=5 // pred_fallthru
        _
    $region6: #{luconv_forward.2} parent=1 // loop_footer
      %s14 = sadd.s32 1, %s10
    $region7: #{luconv_forward.2} parent=1 // loop_footer_branch
      %9 = sbr.rel target = $region3
    $region8: #{luconv_forward.2} parent=1 // loop_exit
      _

// kernel: luconv_forward.3
$region0: #{luconv_forward.3}
  #allocation0 [shape = 'u32[]', space=smem, size = 0x4, offset = 0x4, fixed_abs, tag = 'smem constant byte address 0x4 - core index']
  #allocation1 [shape = 'u32[144,128]{1,0:T(1,128)}', space=vmem, size = 0x12000, scoped, tag = 'internal scratch']
  %s0 = inlined_call_operand.vmem [shape: f32[8,1024], index: 0, kind: input, shape index: {}]
  %s1 = inlined_call_operand.vmem [shape: f32[8,2], index: 1, kind: input, shape index: {}]
  %s2 = inlined_call_operand.vmem [shape: f32[8,1024], index: 2, kind: output, shape index: {}]
  %s3 = sld [smem:[#allocation0]]
  $region41: #{luconv_forward.3} parent=0
    _
  %s5 = ssub.s32 1, %s3
  %s6 = scalar_select 0, %s5, %s3
  loop: start=0, step=1, limit=4
  $region2: #{luconv_forward.3} parent=0 // loop_pre_header
    _
  $region3: #{luconv_forward.3} parent=0 // loop_header
    %s8 = sphi 0, %s12
    %p9 = scmp.ge.s32.totalorder %s8, 4
    %s18 = sphi 0, %s20
    %s21 = sphi 0, %s18
    %s22 = sphi 0, %s21
    %s38 = sphi 0, %s22
    %s42 = sphi 0, %s42
    %s44 = sphi 0, %s42
    %s45 = sphi 0, %s44
    %s59 = sphi 0, %s45
    %s65 = sphi 0, %s67
    %s68 = sphi 0, %s65
    %s69 = sphi 0, %s68
    %s85 = sphi 0, %s69
  $region4: #{luconv_forward.3} parent=0 // loop_header_branch
    %11 = sbr.rel (%p9) target = $region8
  $region5: #{luconv_forward.3} parent=0 // loop_body
    %s13 = ssub.s32 %s8, 1
    %s14 = ssub.s32 %s8, 2
    %s15 = sadd.s32 %s8, 1
    %s16 = ssub.s32 %s8, %s15
    %p17 = scmp.eq.s32.totalorder %s16, 0
    %s19 = sadd.s32 %s18, 1
    %s20 = scalar_select %p17, %s18, %s19
    %p23 = pneg %p17
    %p24 = scmp.eq.s32.totalorder %s8, 1
    %p25 = por %p23, %p24
    %p26 = scmp.ne.s32.totalorder %s18, %s21
    %p27 = scmp.eq.s32.totalorder %s8, 0
    %p28 = por %p26, %p27
    %p29 = scmp.ne.s32.totalorder %s18, %s21
    %p30 = scmp.eq.s32.totalorder %s13, 1
    %p31 = por %p29, %p30
    %p32 = scmp.ne.s32.totalorder %s21, %s22
    %p33 = scmp.eq.s32.totalorder %s13, 0
    %p34 = por %p32, %p33
    %p35 = scmp.ne.s32.totalorder %s21, %s22
    %p36 = scmp.eq.s32.totalorder %s14, 1
    %p37 = por %p35, %p36
    %p39 = scmp.ne.s32.totalorder %s22, %s38
    %p40 = scmp.eq.s32.totalorder %s14, 0
    %p41 = por %p39, %p40
    %s43 = sadd.s32 %s42, 1
    %p46 = scmp.eq.s32.totalorder %s8, 1
    %p47 = scmp.ne.s32.totalorder %s42, %s44
    %p48 = scmp.eq.s32.totalorder %s8, 0
    %p49 = por %p47, %p48
    %p50 = scmp.ne.s32.totalorder %s42, %s44
    %p51 = scmp.eq.s32.totalorder %s13, 1
    %p52 = por %p50, %p51
    %p53 = scmp.ne.s32.totalorder %s44, %s45
    %p54 = scmp.eq.s32.totalorder %s13, 0
    %p55 = por %p53, %p54
    %p56 = scmp.ne.s32.totalorder %s44, %s45
    %p57 = scmp.eq.s32.totalorder %s14, 1
    %p58 = por %p56, %p57
    %p60 = scmp.ne.s32.totalorder %s45, %s59
    %p61 = scmp.eq.s32.totalorder %s14, 0
    %p62 = por %p60, %p61
    %s63 = ssub.s32 %s8, %s15
    %p64 = scmp.eq.s32.totalorder %s63, 0
    %s66 = sadd.s32 %s65, 1
    %s67 = scalar_select %p64, %s65, %s66
    %p70 = pneg %p64
    %p71 = scmp.eq.s32.totalorder %s8, 1
    %p72 = por %p70, %p71
    %p73 = scmp.ne.s32.totalorder %s65, %s68
    %p74 = scmp.eq.s32.totalorder %s8, 0
    %p75 = por %p73, %p74
    %p76 = scmp.ne.s32.totalorder %s65, %s68
    %p77 = scmp.eq.s32.totalorder %s13, 1
    %p78 = por %p76, %p77
    %p79 = scmp.ne.s32.totalorder %s68, %s69
    %p80 = scmp.eq.s32.totalorder %s13, 0
    %p81 = por %p79, %p80
    %p82 = scmp.ne.s32.totalorder %s68, %s69
    %p83 = scmp.eq.s32.totalorder %s14, 1
    %p84 = por %p82, %p83
    %p86 = scmp.ne.s32.totalorder %s69, %s85
    %p87 = scmp.eq.s32.totalorder %s14, 0
    %p88 = por %p86, %p87
    %p89 = scmp.le.s32.totalorder 1, %s8
    %p90 = scmp.lt.s32.totalorder %s8, 3
    %p91 = pnand %p89, %p90
    %p92 = pneg %p91
    // Predicated region
    $region9: #{luconv_forward.3} parent=5 // pred_check
      _
    $region10: #{luconv_forward.3} parent=5 // pred_check_branch
      %94 = sbr.rel (%p91) target = $region12
    $region11: #{luconv_forward.3} parent=5 // pred_region
      %s95 = ssub.s32 %s8, 1
      // Predicated region
      $region13: #{luconv_forward.3} parent=11 // pred_check
        %p96 = pneg %p55
      $region14: #{luconv_forward.3} parent=11 // pred_check_branch
        %98 = sbr.rel (%p96) target = $region16
      $region15: #{luconv_forward.3} parent=11 // pred_region
        _
      $region16: #{luconv_forward.3} parent=11 // pred_fallthru
        _
    $region12: #{luconv_forward.3} parent=5 // pred_fallthru
      _
    %p99 = scmp.lt.s32.totalorder %s8, 2
    // Predicated region
    $region17: #{luconv_forward.3} parent=5 // pred_check
      %p100 = pneg %p99
    $region18: #{luconv_forward.3} parent=5 // pred_check_branch
      %102 = sbr.rel (%p100) target = $region20
    $region19: #{luconv_forward.3} parent=5 // pred_region
      // Predicated region
      $region21: #{luconv_forward.3} parent=19 // pred_check
        %p103 = pneg %p28
      $region22: #{luconv_forward.3} parent=19 // pred_check_branch
        %105 = sbr.rel (%p103) target = $region24
      $region23: #{luconv_forward.3} parent=19 // pred_region
        %s106 = smul.u32 4, %s8
        %p107 = scmp.lt.s32.totalorder %s106, 7
        %s108 = scalar_select %p107, %s106, 7
        %s109 = smul.addr %s108, 8
        %s110 = scalar_lea.vmem %s0, %s109
        %s111 = smul.u32 4, %s8
      $region24: #{luconv_forward.3} parent=19 // pred_fallthru
        _
    $region20: #{luconv_forward.3} parent=5 // pred_fallthru
      _
    %p112 = scmp.le.s32.totalorder 1, %s8
    %p113 = scmp.lt.s32.totalorder %s8, 3
    %p114 = pnand %p112, %p113
    %p115 = pneg %p114
    // Predicated region
    $region25: #{luconv_forward.3} parent=5 // pred_check
      _
    $region26: #{luconv_forward.3} parent=5 // pred_check_branch
      %117 = sbr.rel (%p114) target = $region28
    $region27: #{luconv_forward.3} parent=5 // pred_region
      %s118 = ssub.s32 %s8, 1
      %s119 = smul.u32 4, %s13
      %p120 = scmp.lt.s32.totalorder %s119, 7
      %s121 = scalar_select %p120, %s119, 7
      %s122 = smul.addr %s121, 8
      %s123 = scalar_lea.vmem %s0, %s122
      %p124 = pneg %p34
      %p125 = pneg %p31
      %p126 = pneg %p55
      %p127 = pneg %p52
      %p128 = pneg %p81
      %p129 = pneg %p78
      %s130 = smul.u32 4, %s13
      %p131 = scmp.lt.s32.totalorder %s130, 7
      %s132 = scalar_select %p131, %s130, 7
      %s133 = smul.addr %s132, 8
      %s134 = scalar_lea.vmem %s2, %s133
      %s135 = smul.u32 4, %s13
      %p136 = scmp.lt.s32.totalorder %s135, 7
      %s137 = scalar_select %p136, %s135, 7
      %s138 = smul.addr %s137, 8
      %s139 = scalar_lea.vmem %s0, %s138
      %s140 = smul.u32 4, %s13
      %s141 = smul.u32 4, %s13
      %p142 = scmp.lt.s32.totalorder %s141, 7
      %s143 = scalar_select %p142, %s141, 7
      %s144 = smul.addr %s143, 8
      %s145 = scalar_lea.vmem %s2, %s144
      %s146 = smul.u32 4, %s13
      %v147 = vld [vmem:[%s1] sm:$0xff]
      %v148 = vld [vmem:[%s139] sm:$0xff]
      %v149 = vld [vmem:[%s139 + $0x8] sm:$0xff]
      %v150 = vld [vmem:[%s139 + $0x10] sm:$0xff]
      %v151 = vld [vmem:[%s139 + $0x18] sm:$0xff]
      %153 = vset.pattern.permute.xlu0 0
      %154 = vperm.xlu0 %153, %v147
      %v155 = vpop.permute.xlu0 %154
      %v157 = vmul.f32 %v148, %v155
      %v158 = vmul.f32 %v149, %v155
      %v159 = vmul.f32 %v150, %v155
      %v160 = vmul.f32 %v151, %v155
      %161 = vset.pattern.permute.xlu0 1
      %162 = vperm.xlu0 %161, %v147
      %v163 = vpop.permute.xlu0 %162
      %v165 = vadd.f32 %v157, %v163
      %v166 = vadd.f32 %v158, %v163
      %v167 = vadd.f32 %v159, %v163
      %v168 = vadd.f32 %v160, %v163
      %v169 = vmax.f32 %v165, 0.0
      %v170 = vmax.f32 %v166, 0.0
      %v171 = vmax.f32 %v167, 0.0
      %v172 = vmax.f32 %v168, 0.0
      %173 = vst [vmem:[%s145] sm:$0xff] %v169
      %174 = vst [vmem:[%s145 + $0x8] sm:$0xff] %v170
      %175 = vst [vmem:[%s145 + $0x10] sm:$0xff] %v171
      %176 = vst [vmem:[%s145 + $0x18] sm:$0xff] %v172
      %s177 = smul.u32 4, %s13
      %p178 = scmp.lt.s32.totalorder %s177, 7
      %s179 = scalar_select %p178, %s177, 7
      %s180 = smul.addr %s179, 8
      %s181 = scalar_lea.vmem %s2, %s180
      // Predicated region
      $region29: #{luconv_forward.3} parent=27 // pred_check
        %p182 = pneg %p78
      $region30: #{luconv_forward.3} parent=27 // pred_check_branch
        %184 = sbr.rel (%p182) target = $region32
      $region31: #{luconv_forward.3} parent=27 // pred_region
        %s185 = smul.u32 4, %s13
      $region32: #{luconv_forward.3} parent=27 // pred_fallthru
        _
    $region28: #{luconv_forward.3} parent=5 // pred_fallthru
      _
    %p186 = scmp.le.s32.totalorder 2, %s8
    // Predicated region
    $region33: #{luconv_forward.3} parent=5 // pred_check
      %p187 = pneg %p186
    $region34: #{luconv_forward.3} parent=5 // pred_check_branch
      %189 = sbr.rel (%p187) target = $region36
    $region35: #{luconv_forward.3} parent=5 // pred_region
      %s190 = ssub.s32 %s8, 2
      // Predicated region
      $region37: #{luconv_forward.3} parent=35 // pred_check
        %p191 = pneg %p84
      $region38: #{luconv_forward.3} parent=35 // pred_check_branch
        %193 = sbr.rel (%p191) target = $region40
      $region39: #{luconv_forward.3} parent=35 // pred_region
        %s194 = smul.u32 4, %s14
        %p195 = scmp.lt.s32.totalorder %s194, 7
        %s196 = scalar_select %p195, %s194, 7
        %s197 = smul.addr %s196, 8
        %s198 = scalar_lea.vmem %s2, %s197
      $region40: #{luconv_forward.3} parent=35 // pred_fallthru
        _
    $region36: #{luconv_forward.3} parent=5 // pred_fallthru
      _
  $region6: #{luconv_forward.3} parent=0 // loop_footer
    %s12 = sadd.s32 1, %s8
  $region7: #{luconv_forward.3} parent=0 // loop_footer_branch
    %7 = sbr.rel target = $region3
  $region8: #{luconv_forward.3} parent=0 // loop_exit
    _

</llo_original>
